<compile_context>
chip_gen: v5e
topology: v5e:2x2
jax: 0.10.0
libtpu: 0.0.40
codegen_flags: <defaults>
</compile_context>

<pallas_src>
import functools

import jax
import jax.numpy as jnp
from jax.experimental import pallas as pl
from jax.experimental.pallas import tpu as pltpu


def _ffn_kernel(x_ref, w1_ref, b1_ref, w2_ref, b2_ref, o_ref, acc_ref):
    # x_ref : (tm, d_model)      token tile (resident across the d_ff axis)
    # w1_ref: (d_model, tf)      W1^T chunk (columns of the hidden dim)
    # b1_ref: (1, tf)            bias chunk for linear1
    # w2_ref: (tf, d_model)      W2^T chunk (rows of the hidden dim)
    # b2_ref: (1, d_model)       bias for linear2 (added once, at finalize)
    # o_ref : (tm, d_model)
    # acc_ref: (tm, d_model) f32 accumulator (resident across the d_ff axis)
    k = pl.program_id(1)

    @pl.when(k == 0)
    def _():
        acc_ref[...] = jnp.zeros_like(acc_ref)

    x = x_ref[...]
    h = jnp.dot(x, w1_ref[...], preferred_element_type=jnp.float32) + b1_ref[...]
    h = jnp.maximum(h, 0.0)  # ReLU (module default activation)
    # TODO(synk): training-mode dropout (pltpu.prng_seed + stateful_bernoulli)
    # not implemented; eval mode makes dropout1/dropout2 the identity.
    acc_ref[...] += jnp.dot(h.astype(x.dtype), w2_ref[...],
                            preferred_element_type=jnp.float32)

    @pl.when(k == pl.num_programs(1) - 1)
    def _():
        o_ref[...] = (acc_ref[...] + b2_ref[...]).astype(o_ref.dtype)


def _round_up(n, m):
    return (n + m - 1) // m * m


def _choose_ff_chunk(d_ff, max_chunk):
    """Largest multiple of 128 that divides d_ff and is <= max_chunk (else d_ff)."""
    if d_ff <= max_chunk:
        return d_ff
    c = (max_chunk // 128) * 128
    while c >= 128:
        if d_ff % c == 0:
            return c
        c -= 128
    return d_ff


@functools.partial(jax.jit, static_argnames=("block_rows", "block_ff"))
def feed_forward_layer(x, w1_t, b1, w2_t, b2, *, block_rows=256, block_ff=1024):
    """x: (..., d_model) -> (..., d_model). Fused FFN on TPU via Pallas."""
    orig_shape = x.shape
    d_model = orig_shape[-1]
    d_ff = w1_t.shape[1]

    x2d = x.reshape(-1, d_model)
    n_tokens = x2d.shape[0]

    # Token tile: large (MXU-friendly) but never bigger than the (8-aligned)
    # token count; pad tokens up to a tile multiple instead of asserting.
    tm = min(block_rows, _round_up(n_tokens, 8))
    n_pad = _round_up(n_tokens, tm)
    if n_pad != n_tokens:
        x2d = jnp.pad(x2d, ((0, n_pad - n_tokens), (0, 0)))

    tf = _choose_ff_chunk(d_ff, block_ff)
    n_row_tiles = n_pad // tm
    n_ff_chunks = d_ff // tf

    b1_2d = b1.reshape(1, d_ff)
    b2_2d = b2.reshape(1, d_model)

    # Explicit scoped-VMEM budget (double-buffered streamed tiles + scratch +
    # headroom for the (tm, tf) intermediate), clamped to 64 MiB (v7x safe).
    itemsize = x2d.dtype.itemsize
    est_vmem = (
        2 * tm * d_model * itemsize      # x tile (double-buffered)
        + 2 * tm * d_model * itemsize    # out tile
        + 2 * d_model * tf * itemsize    # W1^T chunk
        + 2 * 8 * tf * itemsize          # b1 chunk (sublane-padded)
        + 2 * tf * d_model * itemsize    # W2^T chunk
        + 2 * 8 * d_model * itemsize     # b2
        + tm * d_model * 4               # f32 accumulator scratch
        + 2 * tm * tf * 4                # f32 intermediate headroom
    )
    vmem_limit = int(min(64 * 1024 * 1024,
                         max(16 * 1024 * 1024, est_vmem * 3 // 2 + (4 << 20))))

    flops = 4 * n_pad * d_model * d_ff  # two matmuls, 2 flops/MAC
    bytes_accessed = (
        2 * n_pad * d_model            # x in + y out
        + 2 * d_model * d_ff           # W1 + W2
        + d_ff + d_model               # biases
    ) * itemsize

    out = pl.pallas_call(
        _ffn_kernel,
        out_shape=jax.ShapeDtypeStruct((n_pad, d_model), x.dtype),
        grid_spec=pltpu.PrefetchScalarGridSpec(
            num_scalar_prefetch=0,
            grid=(n_row_tiles, n_ff_chunks),
            in_specs=[
                pl.BlockSpec((tm, d_model), lambda i, k: (i, 0)),   # x tile
                pl.BlockSpec((d_model, tf), lambda i, k: (0, k)),   # W1^T chunk
                pl.BlockSpec((1, tf), lambda i, k: (0, k)),         # b1 chunk
                pl.BlockSpec((tf, d_model), lambda i, k: (k, 0)),   # W2^T chunk
                pl.BlockSpec((1, d_model), lambda i, k: (0, 0)),    # b2
            ],
            out_specs=pl.BlockSpec((tm, d_model), lambda i, k: (i, 0)),
            scratch_shapes=[pltpu.VMEM((tm, d_model), jnp.float32)],
        ),
        compiler_params=pltpu.CompilerParams(
            dimension_semantics=("parallel", "arbitrary"),
            vmem_limit_bytes=vmem_limit,
        ),
        cost_estimate=pl.CostEstimate(
            flops=flops, transcendentals=0, bytes_accessed=bytes_accessed),
    )(x2d, w1_t, b1_2d, w2_t, b2_2d)

    if n_pad != n_tokens:
        out = out[:n_tokens]
    return out.reshape(orig_shape)


def init_params(key, d_model, dim_feedforward, dtype=jnp.float32):
    """Deterministic init mimicking torch.nn.Linear default U(-1/sqrt(fan_in), +)."""
    k1, k2, k3, k4 = jax.random.split(key, 4)
    bound1 = 1.0 / jnp.sqrt(d_model)
    bound2 = 1.0 / jnp.sqrt(dim_feedforward)
    # Stored transposed: (in, out) so the kernel does x @ W.
    w1_t = jax.random.uniform(k1, (d_model, dim_feedforward), dtype,
                              minval=-bound1, maxval=bound1)
    b1 = jax.random.uniform(k2, (dim_feedforward,), dtype,
                            minval=-bound1, maxval=bound1)
    w2_t = jax.random.uniform(k3, (dim_feedforward, d_model), dtype,
                              minval=-bound2, maxval=bound2)
    b2 = jax.random.uniform(k4, (d_model,), dtype,
                            minval=-bound2, maxval=bound2)
    return w1_t, b1, w2_t, b2


if __name__ == "__main__":
    key = jax.random.PRNGKey(0)

    # --- Test 1: small shapes consistent with the module (batch, seq, d_model).
    # Note: toy d_model=32 (<128) means masked partial stores; fine at this size.
    batch, seq, d_model, d_ff = 2, 8, 32, 64
    kx, kp = jax.random.split(key)
    x = jax.random.normal(kx, (batch, seq, d_model), jnp.float32)
    w1_t, b1, w2_t, b2 = init_params(kp, d_model, d_ff)

    out = jax.block_until_ready(feed_forward_layer(x, w1_t, b1, w2_t, b2))
    ref = jnp.maximum(x @ w1_t + b1, 0.0) @ w2_t + b2
    assert out.shape == x.shape
    assert jnp.allclose(out, ref, atol=1e-5, rtol=1e-5), "mismatch vs reference (test 1)"

    # --- Test 2: exercise token padding + d_ff-chunked accumulation path.
    batch2, seq2, dm2, dff2 = 2, 40, 128, 512   # 80 tokens, tm=32 -> pad to 96; 2 ff chunks
    kx2, kp2 = jax.random.split(kp)
    x2 = jax.random.normal(kx2, (batch2, seq2, dm2), jnp.float32)
    p2 = init_params(kp2, dm2, dff2)
    out2 = jax.block_until_ready(
        feed_forward_layer(x2, *p2, block_rows=32, block_ff=256))
    ref2 = jnp.maximum(x2 @ p2[0] + p2[1], 0.0) @ p2[2] + p2[3]
    assert out2.shape == x2.shape
    assert jnp.allclose(out2, ref2, atol=2e-3, rtol=2e-3), "mismatch vs reference (test 2)"

    print("KERNEL_OK")
</pallas_src>

<mosaic_0001>
module attributes {stable_mosaic.version = 11 : i64} {
  func.func @_ffn_kernel(%arg0: i32, %arg1: i32, %arg2: memref<16x32xf32, #tpu.memory_space<vmem>>, %arg3: memref<32x64xf32, #tpu.memory_space<vmem>>, %arg4: memref<1x64xf32, #tpu.memory_space<vmem>>, %arg5: memref<64x32xf32, #tpu.memory_space<vmem>>, %arg6: memref<1x32xf32, #tpu.memory_space<vmem>>, %arg7: memref<16x32xf32, #tpu.memory_space<vmem>>, %arg8: memref<16x32xf32, #tpu.memory_space<vmem>>) attributes {dimension_semantics = [#tpu.dimension_semantics<parallel>, #tpu.dimension_semantics<arbitrary>], iteration_bounds = array<i64: 1, 1>, scalar_prefetch = 0 : i64, scratch_operands = 1 : i64, tpu.core_type = #tpu.core_type<tc>, window_params = [{transform_indices = @transform_0, window_bounds = array<i64: 16, 32>}, {transform_indices = @transform_1, window_bounds = array<i64: 32, 64>}, {transform_indices = @transform_2, window_bounds = array<i64: 1, 64>}, {transform_indices = @transform_3, window_bounds = array<i64: 64, 32>}, {pipeline_mode = #tpu.pipeline_mode<synchronous>, transform_indices = @transform_4, window_bounds = array<i64: 1, 32>}, {transform_indices = @transform_5, window_bounds = array<i64: 16, 32>}]} {
    %c0_i32 = arith.constant 0 : i32
    %0 = arith.cmpi eq, %arg1, %c0_i32 : i32
    %1 = arith.extui %0 : i1 to i32
    %c0_i32_0 = arith.constant 0 : i32
    %2 = arith.cmpi ne, %1, %c0_i32_0 : i32
    scf.if %2 {
      %cst_16 = arith.constant 0.000000e+00 : f32
      %19 = vector.broadcast %cst_16 : f32 to vector<16x32xf32>
      %c0_17 = arith.constant 0 : index
      %c0_18 = arith.constant 0 : index
      %20 = vector.load %arg8[%c0_17, %c0_18] : memref<16x32xf32, #tpu.memory_space<vmem>>, vector<16x32xf32>
      tpu.vector_store %arg8[%c0_17, %c0_18], %19 {strides = array<i32>} : memref<16x32xf32, #tpu.memory_space<vmem>>, vector<16x32xf32>,
    } else {
    }
    %c0 = arith.constant 0 : index
    %c0_1 = arith.constant 0 : index
    %3 = vector.load %arg2[%c0, %c0_1] : memref<16x32xf32, #tpu.memory_space<vmem>>, vector<16x32xf32>
    %c0_2 = arith.constant 0 : index
    %c0_3 = arith.constant 0 : index
    %4 = vector.load %arg3[%c0_2, %c0_3] : memref<32x64xf32, #tpu.memory_space<vmem>>, vector<32x64xf32>
    %cst = arith.constant dense<0.000000e+00> : vector<16x64xf32>
    %5 = tpu.matmul %3, %4, %cst {dimension_numbers = #tpu.dot_dimension_numbers<[1], [0], [0], [1], [0, 0, 1, 1], [], []>} : vector<16x32xf32>, vector<32x64xf32>, vector<16x64xf32> -> vector<16x64xf32>
    %c0_4 = arith.constant 0 : index
    %c0_5 = arith.constant 0 : index
    %6 = vector.load %arg4[%c0_4, %c0_5] : memref<1x64xf32, #tpu.memory_space<vmem>>, vector<1x64xf32>
    %7 = vector.broadcast %6 : vector<1x64xf32> to vector<16x64xf32>
    %8 = arith.addf %5, %7 : vector<16x64xf32>
    %cst_6 = arith.constant 0.000000e+00 : f32
    %9 = vector.broadcast %cst_6 : f32 to vector<16x64xf32>
    %10 = arith.maximumf %8, %9 : vector<16x64xf32>
    %c0_7 = arith.constant 0 : index
    %c0_8 = arith.constant 0 : index
    %11 = vector.load %arg8[%c0_7, %c0_8] : memref<16x32xf32, #tpu.memory_space<vmem>>, vector<16x32xf32>
    %c0_9 = arith.constant 0 : index
    %c0_10 = arith.constant 0 : index
    %12 = vector.load %arg5[%c0_9, %c0_10] : memref<64x32xf32, #tpu.memory_space<vmem>>, vector<64x32xf32>
    %cst_11 = arith.constant dense<0.000000e+00> : vector<16x32xf32>
    %13 = tpu.matmul %10, %12, %cst_11 {dimension_numbers = #tpu.dot_dimension_numbers<[1], [0], [0], [1], [0, 0, 1, 1], [], []>} : vector<16x64xf32>, vector<64x32xf32>, vector<16x32xf32> -> vector<16x32xf32>
    %14 = arith.addf %11, %13 : vector<16x32xf32>
    %c0_12 = arith.constant 0 : index
    %c0_13 = arith.constant 0 : index
    %15 = vector.load %arg8[%c0_12, %c0_13] : memref<16x32xf32, #tpu.memory_space<vmem>>, vector<16x32xf32>
    tpu.vector_store %arg8[%c0_12, %c0_13], %14 {strides = array<i32>} : memref<16x32xf32, #tpu.memory_space<vmem>>, vector<16x32xf32>,
    %c0_i32_14 = arith.constant 0 : i32
    %16 = arith.cmpi eq, %arg1, %c0_i32_14 : i32
    %17 = arith.extui %16 : i1 to i32
    %c0_i32_15 = arith.constant 0 : i32
    %18 = arith.cmpi ne, %17, %c0_i32_15 : i32
    scf.if %18 {
      %c0_16 = arith.constant 0 : index
      %c0_17 = arith.constant 0 : index
      %19 = vector.load %arg8[%c0_16, %c0_17] : memref<16x32xf32, #tpu.memory_space<vmem>>, vector<16x32xf32>
      %c0_18 = arith.constant 0 : index
      %c0_19 = arith.constant 0 : index
      %20 = vector.load %arg6[%c0_18, %c0_19] : memref<1x32xf32, #tpu.memory_space<vmem>>, vector<1x32xf32>
      %21 = vector.broadcast %20 : vector<1x32xf32> to vector<16x32xf32>
      %22 = arith.addf %19, %21 : vector<16x32xf32>
      %c0_20 = arith.constant 0 : index
      %c0_21 = arith.constant 0 : index
      %23 = vector.load %arg7[%c0_20, %c0_21] : memref<16x32xf32, #tpu.memory_space<vmem>>, vector<16x32xf32>
      tpu.vector_store %arg7[%c0_20, %c0_21], %22 {strides = array<i32>} : memref<16x32xf32, #tpu.memory_space<vmem>>, vector<16x32xf32>,
    } else {
    }
    return
  }
  func.func @transform_0(%arg0: i32, %arg1: i32) -> (i32, i32) {
    %c0_i32 = arith.constant 0 : i32
    %c0_i32_0 = arith.constant 0 : i32
    return %arg0, %c0_i32 : i32, i32
  }
  func.func @transform_1(%arg0: i32, %arg1: i32) -> (i32, i32) {
    %c0_i32 = arith.constant 0 : i32
    %c0_i32_0 = arith.constant 0 : i32
    return %c0_i32, %arg1 : i32, i32
  }
  func.func @transform_2(%arg0: i32, %arg1: i32) -> (i32, i32) {
    %c0_i32 = arith.constant 0 : i32
    %c0_i32_0 = arith.constant 0 : i32
    return %c0_i32, %arg1 : i32, i32
  }
  func.func @transform_3(%arg0: i32, %arg1: i32) -> (i32, i32) {
    %c0_i32 = arith.constant 0 : i32
    %c0_i32_0 = arith.constant 0 : i32
    return %arg1, %c0_i32 : i32, i32
  }
  func.func @transform_4(%arg0: i32, %arg1: i32) -> (i32, i32) {
    %c0_i32 = arith.constant 0 : i32
    %c0_i32_0 = arith.constant 0 : i32
    %c0_i32_1 = arith.constant 0 : i32
    return %c0_i32, %c0_i32_0 : i32, i32
  }
  func.func @transform_5(%arg0: i32, %arg1: i32) -> (i32, i32) {
    %c0_i32 = arith.constant 0 : i32
    %c0_i32_0 = arith.constant 0 : i32
    return %arg0, %c0_i32 : i32, i32
  }
}

</mosaic_0001>

<llo_original>
// kernel: feed_forward_layer.1
$region0: #{feed_forward_layer.1}
  #allocation0 [shape = 'u32[]', space=smem, size = 0x4, offset = 0x4, fixed_abs, tag = 'smem constant byte address 0x4 - core index']
  #allocation1 [shape = 'u32[72,128]{1,0:T(1,128)}', space=vmem, size = 0x9000, scoped, tag = 'internal scratch']
  #allocation2 [shape = 'f32[16,32]{1,0:T(8,128)}', space=vmem, size = 0x2000, scoped, tag = 'scratch operand']
  %s0 = inlined_call_operand.vmem [shape: f32[16,32], index: 0, kind: input, shape index: {}]
  %s1 = inlined_call_operand.vmem [shape: f32[32,64], index: 1, kind: input, shape index: {}]
  %s2 = inlined_call_operand.vmem [shape: f32[1,64], index: 2, kind: input, shape index: {}]
  %s3 = inlined_call_operand.vmem [shape: f32[64,32], index: 3, kind: input, shape index: {}]
  %s4 = inlined_call_operand.vmem [shape: f32[1,32], index: 4, kind: input, shape index: {}]
  %s5 = inlined_call_operand.hbm [shape: f32[16,32], index: 5, kind: output, shape index: {}]
  %s6 = sld [smem:[#allocation0]]
  $region38: #{feed_forward_layer.1} parent=0
    _
  %s8 = ssub.s32 1, %s6
  %s9 = scalar_select 0, %s8, %s6
  $region1: #{feed_forward_layer.1} parent=0
    #allocation3 [shape = 'u8[8192]{0}', space=vmem, size = 0x2000, scoped, tag = 'output window, operand 0, single buffered']
    #allocation4 [shape = 's32[1]{0}', space=sflag, size = 0x4, scoped, tag = 'scoped memory for feed_forward_layer.1']
    %10 = vsyncpa [#allocation4], 0
    // Predicated region
    $region2: #{feed_forward_layer.1} parent=1 // pred_check
      _
    $region3: #{feed_forward_layer.1} parent=1 // pred_check_branch
      %12 = sbr.rel (0) target = $region5
    $region4: #{feed_forward_layer.1} parent=1 // pred_region
      _
    $region5: #{feed_forward_layer.1} parent=1 // pred_fallthru
      _
    // Predicated region
    $region6: #{feed_forward_layer.1} parent=1 // pred_check
      _
    $region7: #{feed_forward_layer.1} parent=1 // pred_check_branch
      %14 = sbr.rel (0) target = $region9
    $region8: #{feed_forward_layer.1} parent=1 // pred_region
      _
    $region9: #{feed_forward_layer.1} parent=1 // pred_fallthru
      _
    // Predicated region
    $region10: #{feed_forward_layer.1} parent=1 // pred_check
      _
    $region11: #{feed_forward_layer.1} parent=1 // pred_check_branch
      %16 = sbr.rel (0) target = $region13
    $region12: #{feed_forward_layer.1} parent=1 // pred_region
      _
    $region13: #{feed_forward_layer.1} parent=1 // pred_fallthru
      _
    // Predicated region
    $region14: #{feed_forward_layer.1} parent=1 // pred_check
      _
    $region15: #{feed_forward_layer.1} parent=1 // pred_check_branch
      %18 = sbr.rel (0) target = $region17
    $region16: #{feed_forward_layer.1} parent=1 // pred_region
      _
    $region17: #{feed_forward_layer.1} parent=1 // pred_fallthru
      _
    // Predicated region
    $region18: #{feed_forward_layer.1} parent=1 // pred_check
      _
    $region19: #{feed_forward_layer.1} parent=1 // pred_check_branch
      %20 = sbr.rel (0) target = $region21
    $region20: #{feed_forward_layer.1} parent=1 // pred_region
      _
    $region21: #{feed_forward_layer.1} parent=1 // pred_fallthru
      _
    %p21 = scmp.eq.s32.totalorder 0, 0
    // Predicated region
    $region22: #{feed_forward_layer.1} parent=1 // pred_check
      %p22 = pneg %p21
    $region23: #{feed_forward_layer.1} parent=1 // pred_check_branch
      %24 = sbr.rel (%p22) target = $region25
    $region24: #{feed_forward_layer.1} parent=1 // pred_region
      %vm25 = vcmask 261120
      %26 = vst.msk [vmem:[#allocation2] sm:$0xff] %vm25, 0.0
      %27 = vst.msk [vmem:[#allocation2 + $0x8] sm:$0xff] %vm25, 0.0
    $region25: #{feed_forward_layer.1} parent=1 // pred_fallthru
      _
    %v28 = vld [vmem:[%s0] sm:$0xff]
    %v29 = vld [vmem:[%s0 + $0x8] sm:$0xff]
    %v30 = vld [vmem:[%s1] sm:$0xff]
    %v31 = vld [vmem:[%s1 + $0x8] sm:$0xff]
    %v32 = vld [vmem:[%s1 + $0x10] sm:$0xff]
    %v33 = vld [vmem:[%s1 + $0x18] sm:$0xff]
    %v34 = vld [vmem:[%s2] sm:$0x1]
    %v36 = vperm.slane %v34, 0
    %vm38 = vcmask 261120
    %v40 = vsel %vm38, %v28, 0
    %v43 = vsel %vm38, %v29, 0
    %45 = vmatpush.msra.mxu0 0.0
    %46 = vmatpush.msra.mxu0 0.0
    %47 = vmatpush.msra.mxu0 0.0
    %48 = vmatpush.msra.mxu0 0.0
    %49 = vmatpush.msra.mxu0 0.0
    %50 = vmatpush.msra.mxu0 0.0
    %51 = vmatpush.msra.mxu0 0.0
    %52 = vmatpush.msra.mxu0 0.0
    %53 = vmatpush.msra.mxu0 0.0
    %54 = vmatpush.msra.mxu0 0.0
    %55 = vmatpush.msra.mxu0 0.0
    %56 = vmatpush.msra.mxu0 0.0
    %57 = vmatpush.msra.mxu0 %v33
    %58 = vmatpush.msra.mxu0 %v32
    %59 = vmatpush.msra.mxu0 %v31
    %60 = vmatpush.msra.mxu0 %v30
    %61 = vmatmul.f32.gmra.mxu0 %v40
    %v62 = vpop.f32.mrf.mxu0
    %v63 = vadd.f32 %v36, %v62
    %64 = vmatmul.f32.gmra.mxu0 %v43
    %v65 = vpop.f32.mrf.mxu0
    %v66 = vadd.f32 %v36, %v65
    %67 = vdwg.mxu0
    %v68 = vmax.f32 %v63, 0.0
    %v69 = vmax.f32 %v66, 0.0
    %v70 = vld [vmem:[#allocation2] sm:$0xff]
    %v71 = vld [vmem:[#allocation2 + $0x8] sm:$0xff]
    %v72 = vld [vmem:[%s3] sm:$0xff]
    %v73 = vld [vmem:[%s3 + $0x8] sm:$0xff]
    %v74 = vld [vmem:[%s3 + $0x10] sm:$0xff]
    %v75 = vld [vmem:[%s3 + $0x18] sm:$0xff]
    %v76 = vld [vmem:[%s3 + $0x20] sm:$0xff]
    %v77 = vld [vmem:[%s3 + $0x28] sm:$0xff]
    %v78 = vld [vmem:[%s3 + $0x30] sm:$0xff]
    %v79 = vld [vmem:[%s3 + $0x38] sm:$0xff]
    %vm80 = vcmask 523264
    %v82 = vsel %vm80, %v68, 0
    %v85 = vsel %vm80, %v69, 0
    %87 = vmatpush.msra.mxu0 0.0
    %88 = vmatpush.msra.mxu0 0.0
    %89 = vmatpush.msra.mxu0 0.0
    %90 = vmatpush.msra.mxu0 0.0
    %91 = vmatpush.msra.mxu0 0.0
    %92 = vmatpush.msra.mxu0 0.0
    %93 = vmatpush.msra.mxu0 0.0
    %94 = vmatpush.msra.mxu0 0.0
    %95 = vmatpush.msra.mxu0 %v79
    %96 = vmatpush.msra.mxu0 %v78
    %97 = vmatpush.msra.mxu0 %v77
    %98 = vmatpush.msra.mxu0 %v76
    %99 = vmatpush.msra.mxu0 %v75
    %100 = vmatpush.msra.mxu0 %v74
    %101 = vmatpush.msra.mxu0 %v73
    %102 = vmatpush.msra.mxu0 %v72
    %103 = vmatmul.f32.gmra.mxu0 %v82
    %v104 = vpop.f32.mrf.mxu0
    %v105 = vadd.f32 0.0, %v104
    %106 = vmatmul.f32.gmra.mxu0 %v85
    %v107 = vpop.f32.mrf.mxu0
    %v108 = vadd.f32 0.0, %v107
    %109 = vdwg.mxu0
    %v110 = vadd.f32 %v70, %v105
    %v111 = vadd.f32 %v71, %v108
    %112 = vst.msk [vmem:[#allocation2] sm:$0xff] %vm38, %v110
    %113 = vst.msk [vmem:[#allocation2 + $0x8] sm:$0xff] %vm38, %v111
    // Predicated region
    $region26: #{feed_forward_layer.1} parent=1 // pred_check
      %p114 = pneg %p21
    $region27: #{feed_forward_layer.1} parent=1 // pred_check_branch
      %116 = sbr.rel (%p114) target = $region29
    $region28: #{feed_forward_layer.1} parent=1 // pred_region
      %v117 = vld [vmem:[#allocation2] sm:$0xff]
      %v118 = vld [vmem:[#allocation2 + $0x8] sm:$0xff]
      %v119 = vld [vmem:[%s4] sm:$0x1]
      %v121 = vperm.slane %v119, 0
      %v123 = vadd.f32 %v117, %v121
      %v124 = vadd.f32 %v118, %v121
      %125 = vst.msk [vmem:[#allocation3] sm:$0xff] %vm38, %v123
      %126 = vst.msk [vmem:[#allocation3 + $0x8] sm:$0xff] %vm38, %v124
    $region29: #{feed_forward_layer.1} parent=1 // pred_fallthru
      _
    // Predicated region
    $region30: #{feed_forward_layer.1} parent=1 // pred_check
      _
    $region31: #{feed_forward_layer.1} parent=1 // pred_check_branch
      %128 = sbr.rel (0) target = $region33
    $region32: #{feed_forward_layer.1} parent=1 // pred_region
      %130 = vsyncadd [#allocation4], 0
      %s131 = sshll.u32 [#allocation3], 4
      %s132 = int_to_ptr.vmem [resolvable:$true] %s131
      %s133 = sshll.u32 %s5, 4
      %s134 = int_to_ptr.hbm [resolvable:$true] %s133
      %139 = dma.vmem_to_hbm [thread:$0]  %s132, 256, %s134, [#allocation4], 128, 128, 8
    $region33: #{feed_forward_layer.1} parent=1 // pred_fallthru
      _
    // Predicated region
    $region34: #{feed_forward_layer.1} parent=1 // pred_check
      _
    $region35: #{feed_forward_layer.1} parent=1 // pred_check_branch
      %141 = sbr.rel (0) target = $region37
    $region36: #{feed_forward_layer.1} parent=1 // pred_region
      %143 = dma.done [#allocation4], 256
    $region37: #{feed_forward_layer.1} parent=1 // pred_fallthru
      _
    %144 = vsyncpa [#allocation4], 1

</llo_original>
